<compile_context>
chip_gen: v5e
topology: v5e:2x2
jax: 0.10.0
libtpu: 0.0.40
codegen_flags: <defaults>
</compile_context>

<pallas_src>
import jax
import jax.numpy as jnp
from jax.experimental import pallas as pl
from jax.experimental.pallas import tpu as pltpu


def _user_encoder_kernel(x_ref, mask_ref, w1_ref, b1_ref, w2_ref,
                         bc_ref, rd_ref, out_ref):
    """One grid step = BB batch rows.

    x_ref    : (BB, L*D)  packed clicked-news embeddings (storage dtype)
    mask_ref : (BB, L)    log mask pre-scaled by exp(b2)      (f32)
    w1_ref   : (L*D, L*H) block-diagonal fc1 weight kron(I_L, W1)
    b1_ref   : (1, L*H)   fc1 bias tiled L times              (f32)
    w2_ref   : (L*H, L)   fc2 weight as per-position columns kron(I_L, w2)
    bc_ref   : (L, L*D)   0/1 lane-group broadcast matrix     (f32)
    rd_ref   : (L*D, D)   0/1 lane-group reduction matrix     (f32)
    out_ref  : (BB, D)    pooled user vectors
    """
    # fc1: one lane-dense MXU matmul straight from the storage dtype
    # (bf16 inputs go to the MXU natively; accumulation is f32).
    e = jnp.tanh(
        jnp.dot(x_ref[...], w1_ref[...], preferred_element_type=jnp.float32)
        + b1_ref[...])                                           # (BB, L*H) f32

    # fc2 (H -> 1 per log position) on the MXU: (BB, L*H) @ (L*H, L).
    # Keeps the XLU free of cross-lane reduces; the MXU has plenty of slack.
    logits = jnp.dot(e, w2_ref[...], preferred_element_type=jnp.float32)

    # Masked exp-normalization.  b2 is already folded into the mask as
    # exp(b2), so q == exp(logit + b2) * mask exactly as in the reference.
    # No max-subtraction (faithful to the module; tanh bounds |logit| by
    # ||w2||_1 so exp cannot overflow in f32).
    q = jnp.exp(logits) * mask_ref[...].astype(jnp.float32)      # (BB, L)
    denom = jnp.sum(q, axis=-1, keepdims=True) + 1e-8            # (BB, 1)
    # Exact divide keeps the 1e-4 test tolerance; in production
    # `q * pl.reciprocal(denom, approx=True)` moves this onto the EUP slot.
    w = q / denom                                                # (BB, L)

    # Pooling without any XLU relayout: broadcast the normalized weights to
    # each D-lane group via the MXU ((BB,L) @ (L,L*D)), scale on the VPU,
    # then reduce the L groups with another MXU matmul ((BB,L*D) @ (L*D,D)).
    wb = jnp.dot(w, bc_ref[...], preferred_element_type=jnp.float32)
    scaled = x_ref[...].astype(jnp.float32) * wb                 # (BB, L*D)
    user = jnp.dot(scaled, rd_ref[...], preferred_element_type=jnp.float32)
    out_ref[...] = user.astype(out_ref.dtype)


def user_encoder_forward(log_vec, log_mask, params, block_b=2048):
    """JAX wrapper mirroring UserEncoder.forward(log_vec, log_mask) -> (B, D).

    log_vec  : (B, L, D) clicked-news embeddings (f32 or bf16)
    log_mask : (B, L)    0/1 mask
    params   : (W1 (D,H), b1 (H,), w2 (H,), b2 scalar) of AdditiveAttention
    """
    W1, b1, w2, b2 = params
    B, L, D = log_vec.shape
    H = W1.shape[1]
    LD, LH = L * D, L * H

    # Batch block: must be a multiple of 8 (sublane rule) whenever BB < Bp.
    block_b = max(8, (int(block_b) // 8) * 8)
    if B <= block_b:
        BB, Bp = B, B                      # single step: full-dim block
    else:
        BB = block_b
        Bp = ((B + BB - 1) // BB) * BB
    # NOTE (v7x): with 2 TensorCores/chip the grid needs >= 2 steps to use
    # both cores; pass a smaller block_b for large single-step batches.

    # Free contiguous reinterpret: (B, L, D) -> (B, L*D) lane-dense slab.
    x2d = log_vec.reshape(B, LD)
    # Fold b2 exactly into the mask: exp(l + b2) * m == exp(l) * (m * exp(b2))
    # and the +1e-8 denominator then matches the reference module exactly.
    mask2 = log_mask.astype(jnp.float32) * jnp.exp(jnp.asarray(b2, jnp.float32))
    if Bp != B:
        pad = Bp - B
        x2d = jnp.pad(x2d, ((0, pad), (0, 0)))
        mask2 = jnp.pad(mask2, ((0, pad), (0, 0)))

    eyeL = jnp.eye(L, dtype=jnp.float32)
    # fc1 weight in the input's storage dtype so bf16 inputs hit the MXU
    # natively; the remaining constants stay f32 (they touch f32 operands).
    w1b = jnp.kron(eyeL, W1.astype(jnp.float32)).astype(log_vec.dtype)  # (LD, LH)
    b1t = jnp.tile(b1.astype(jnp.float32).reshape(1, H), (1, L))        # (1, LH)
    w2m = jnp.kron(eyeL, w2.astype(jnp.float32).reshape(H, 1))          # (LH, L)
    bcm = jnp.kron(eyeL, jnp.ones((1, D), jnp.float32))                 # (L, LD)
    rdm = jnp.tile(jnp.eye(D, dtype=jnp.float32), (L, 1))               # (LD, D)

    user = pl.pallas_call(
        _user_encoder_kernel,
        out_shape=jax.ShapeDtypeStruct((Bp, D), log_vec.dtype),
        grid_spec=pltpu.PrefetchScalarGridSpec(
            num_scalar_prefetch=0,
            grid=(Bp // BB,),
            in_specs=[
                pl.BlockSpec((BB, LD), lambda b: (b, 0)),   # packed clicks
                pl.BlockSpec((BB, L), lambda b: (b, 0)),    # mask * exp(b2)
                pl.BlockSpec((LD, LH), lambda b: (0, 0)),   # kron(I_L, W1)
                pl.BlockSpec((1, LH), lambda b: (0, 0)),    # tiled b1
                pl.BlockSpec((LH, L), lambda b: (0, 0)),    # kron(I_L, w2)
                pl.BlockSpec((L, LD), lambda b: (0, 0)),    # 0/1 broadcast
                pl.BlockSpec((LD, D), lambda b: (0, 0)),    # 0/1 reduce
            ],
            out_specs=pl.BlockSpec((BB, D), lambda b: (b, 0)),
        ),
        compiler_params=pltpu.CompilerParams(
            dimension_semantics=("parallel",),
            # Headroom for the 2048-row default block (double-buffered input
            # + f32 temporaries) even on v5e's smaller default scoped limit;
            # stays below v7x's 64 MiB physical VMEM per core.
            vmem_limit_bytes=48 * 1024 * 1024),
    )(x2d, mask2, w1b, b1t, w2m, bcm, rdm)

    return user[:B]


def _reference(log_vec, log_mask, params):
    """Pure-JAX reference of the same forward (mirrors the PyTorch module)."""
    W1, b1, w2, b2 = params
    e = jnp.tanh(jnp.einsum("bld,dh->blh", log_vec, W1) + b1)
    a = jnp.exp(jnp.einsum("blh,h->bl", e, w2) + b2)
    a = a * log_mask.astype(jnp.float32)
    a = a / (jnp.sum(a, axis=1, keepdims=True) + 1e-8)
    return jnp.einsum("bl,bld->bd", a, log_vec)


if __name__ == "__main__":
    # Small shapes consistent with the module:
    # news_dim D=32, user_query_vector_dim H=16, user_log_length L=8, batch B=2.
    B, L, D, H = 2, 8, 32, 16

    key = jax.random.PRNGKey(0)
    k1, k2, k3, k4 = jax.random.split(key, 4)

    log_vec = jax.random.normal(k1, (B, L, D), dtype=jnp.float32)
    log_mask = (jax.random.uniform(k2, (B, L)) > 0.3).astype(jnp.float32)

    W1 = jax.random.normal(k3, (D, H), dtype=jnp.float32) * 0.1
    b1 = jnp.zeros((H,), dtype=jnp.float32)
    w2 = jax.random.normal(k4, (H,), dtype=jnp.float32) * 0.1
    b2 = jnp.float32(0.3)
    params = (W1, b1, w2, b2)

    user = user_encoder_forward(log_vec, log_mask, params)
    jax.block_until_ready(user)

    ref = _reference(log_vec, log_mask, params)
    assert user.shape == (B, D)
    assert jnp.allclose(user, ref, atol=1e-4, rtol=1e-4), "mismatch vs reference"

    # Exercise the multi-step (grid > 1) batch-blocked path, including the
    # enforced rounding of block_b to a multiple of 8.
    B2 = 16
    kk1, kk2 = jax.random.split(jax.random.PRNGKey(1), 2)
    log_vec2 = jax.random.normal(kk1, (B2, L, D), dtype=jnp.float32)
    log_mask2 = (jax.random.uniform(kk2, (B2, L)) > 0.3).astype(jnp.float32)
    user2 = user_encoder_forward(log_vec2, log_mask2, params, block_b=8)
    jax.block_until_ready(user2)
    ref2 = _reference(log_vec2, log_mask2, params)
    assert jnp.allclose(user2, ref2, atol=1e-4, rtol=1e-4), "mismatch (blocked)"

    print("KERNEL_OK")
</pallas_src>

<mosaic_0001>
module attributes {stable_mosaic.version = 11 : i64} {
  func.func @_user_encoder_kernel(%arg0: i32, %arg1: memref<2x256xf32, #tpu.memory_space<vmem>>, %arg2: memref<2x8xf32, #tpu.memory_space<vmem>>, %arg3: memref<256x128xf32, #tpu.memory_space<vmem>>, %arg4: memref<1x128xf32, #tpu.memory_space<vmem>>, %arg5: memref<128x8xf32, #tpu.memory_space<vmem>>, %arg6: memref<8x256xf32, #tpu.memory_space<vmem>>, %arg7: memref<256x32xf32, #tpu.memory_space<vmem>>, %arg8: memref<2x32xf32, #tpu.memory_space<vmem>>) attributes {dimension_semantics = [#tpu.dimension_semantics<parallel>], iteration_bounds = array<i64: 1>, scalar_prefetch = 0 : i64, scratch_operands = 0 : i64, tpu.core_type = #tpu.core_type<tc>, window_params = [{transform_indices = @transform_0, window_bounds = array<i64: 2, 256>}, {transform_indices = @transform_1, window_bounds = array<i64: 2, 8>}, {pipeline_mode = #tpu.pipeline_mode<synchronous>, transform_indices = @transform_2, window_bounds = array<i64: 256, 128>}, {pipeline_mode = #tpu.pipeline_mode<synchronous>, transform_indices = @transform_3, window_bounds = array<i64: 1, 128>}, {pipeline_mode = #tpu.pipeline_mode<synchronous>, transform_indices = @transform_4, window_bounds = array<i64: 128, 8>}, {pipeline_mode = #tpu.pipeline_mode<synchronous>, transform_indices = @transform_5, window_bounds = array<i64: 8, 256>}, {pipeline_mode = #tpu.pipeline_mode<synchronous>, transform_indices = @transform_6, window_bounds = array<i64: 256, 32>}, {transform_indices = @transform_7, window_bounds = array<i64: 2, 32>}]} {
    %c0 = arith.constant 0 : index
    %c0_0 = arith.constant 0 : index
    %0 = vector.load %arg1[%c0, %c0_0] : memref<2x256xf32, #tpu.memory_space<vmem>>, vector<2x256xf32>
    %c0_1 = arith.constant 0 : index
    %c0_2 = arith.constant 0 : index
    %1 = vector.load %arg3[%c0_1, %c0_2] : memref<256x128xf32, #tpu.memory_space<vmem>>, vector<256x128xf32>
    %cst = arith.constant dense<0.000000e+00> : vector<2x128xf32>
    %2 = tpu.matmul %0, %1, %cst {dimension_numbers = #tpu.dot_dimension_numbers<[1], [0], [0], [1], [0, 0, 1, 1], [], []>} : vector<2x256xf32>, vector<256x128xf32>, vector<2x128xf32> -> vector<2x128xf32>
    %c0_3 = arith.constant 0 : index
    %c0_4 = arith.constant 0 : index
    %3 = vector.load %arg4[%c0_3, %c0_4] : memref<1x128xf32, #tpu.memory_space<vmem>>, vector<1x128xf32>
    %4 = vector.broadcast %3 : vector<1x128xf32> to vector<2x128xf32>
    %5 = arith.addf %2, %4 : vector<2x128xf32>
    %6 = math.tanh %5 : vector<2x128xf32>
    %c0_5 = arith.constant 0 : index
    %c0_6 = arith.constant 0 : index
    %7 = vector.load %arg5[%c0_5, %c0_6] : memref<128x8xf32, #tpu.memory_space<vmem>>, vector<128x8xf32>
    %cst_7 = arith.constant dense<0.000000e+00> : vector<2x8xf32>
    %8 = tpu.matmul %6, %7, %cst_7 {dimension_numbers = #tpu.dot_dimension_numbers<[1], [0], [0], [1], [0, 0, 1, 1], [], []>} : vector<2x128xf32>, vector<128x8xf32>, vector<2x8xf32> -> vector<2x8xf32>
    %9 = math.exp %8 : vector<2x8xf32>
    %c0_8 = arith.constant 0 : index
    %c0_9 = arith.constant 0 : index
    %10 = vector.load %arg2[%c0_8, %c0_9] : memref<2x8xf32, #tpu.memory_space<vmem>>, vector<2x8xf32>
    %11 = arith.mulf %9, %10 : vector<2x8xf32>
    %cst_10 = arith.constant dense<0.000000e+00> : vector<2xf32>
    %12 = vector.multi_reduction <add>, %11, %cst_10 [1] : vector<2x8xf32> to vector<2xf32>
    %13 = vector.shape_cast %12 : vector<2xf32> to vector<2x1xf32>
    %cst_11 = arith.constant 9.99999993E-9 : f32
    %14 = vector.broadcast %cst_11 : f32 to vector<2x1xf32>
    %15 = arith.addf %13, %14 : vector<2x1xf32>
    %16 = vector.broadcast %15 : vector<2x1xf32> to vector<2x8xf32>
    %17 = arith.divf %11, %16 : vector<2x8xf32>
    %c0_12 = arith.constant 0 : index
    %c0_13 = arith.constant 0 : index
    %18 = vector.load %arg6[%c0_12, %c0_13] : memref<8x256xf32, #tpu.memory_space<vmem>>, vector<8x256xf32>
    %cst_14 = arith.constant dense<0.000000e+00> : vector<2x256xf32>
    %19 = tpu.matmul %17, %18, %cst_14 {dimension_numbers = #tpu.dot_dimension_numbers<[1], [0], [0], [1], [0, 0, 1, 1], [], []>} : vector<2x8xf32>, vector<8x256xf32>, vector<2x256xf32> -> vector<2x256xf32>
    %c0_15 = arith.constant 0 : index
    %c0_16 = arith.constant 0 : index
    %20 = vector.load %arg1[%c0_15, %c0_16] : memref<2x256xf32, #tpu.memory_space<vmem>>, vector<2x256xf32>
    %21 = arith.mulf %20, %19 : vector<2x256xf32>
    %c0_17 = arith.constant 0 : index
    %c0_18 = arith.constant 0 : index
    %22 = vector.load %arg7[%c0_17, %c0_18] : memref<256x32xf32, #tpu.memory_space<vmem>>, vector<256x32xf32>
    %cst_19 = arith.constant dense<0.000000e+00> : vector<2x32xf32>
    %23 = tpu.matmul %21, %22, %cst_19 {dimension_numbers = #tpu.dot_dimension_numbers<[1], [0], [0], [1], [0, 0, 1, 1], [], []>} : vector<2x256xf32>, vector<256x32xf32>, vector<2x32xf32> -> vector<2x32xf32>
    %c0_20 = arith.constant 0 : index
    %c0_21 = arith.constant 0 : index
    %24 = vector.load %arg8[%c0_20, %c0_21] : memref<2x32xf32, #tpu.memory_space<vmem>>, vector<2x32xf32>
    tpu.vector_store %arg8[%c0_20, %c0_21], %23 {strides = array<i32>} : memref<2x32xf32, #tpu.memory_space<vmem>>, vector<2x32xf32>,
    return
  }
  func.func @transform_0(%arg0: i32) -> (i32, i32) {
    %c0_i32 = arith.constant 0 : i32
    %c0_i32_0 = arith.constant 0 : i32
    return %arg0, %c0_i32 : i32, i32
  }
  func.func @transform_1(%arg0: i32) -> (i32, i32) {
    %c0_i32 = arith.constant 0 : i32
    %c0_i32_0 = arith.constant 0 : i32
    return %arg0, %c0_i32 : i32, i32
  }
  func.func @transform_2(%arg0: i32) -> (i32, i32) {
    %c0_i32 = arith.constant 0 : i32
    %c0_i32_0 = arith.constant 0 : i32
    %c0_i32_1 = arith.constant 0 : i32
    return %c0_i32, %c0_i32_0 : i32, i32
  }
  func.func @transform_3(%arg0: i32) -> (i32, i32) {
    %c0_i32 = arith.constant 0 : i32
    %c0_i32_0 = arith.constant 0 : i32
    %c0_i32_1 = arith.constant 0 : i32
    return %c0_i32, %c0_i32_0 : i32, i32
  }
  func.func @transform_4(%arg0: i32) -> (i32, i32) {
    %c0_i32 = arith.constant 0 : i32
    %c0_i32_0 = arith.constant 0 : i32
    %c0_i32_1 = arith.constant 0 : i32
    return %c0_i32, %c0_i32_0 : i32, i32
  }
  func.func @transform_5(%arg0: i32) -> (i32, i32) {
    %c0_i32 = arith.constant 0 : i32
    %c0_i32_0 = arith.constant 0 : i32
    %c0_i32_1 = arith.constant 0 : i32
    return %c0_i32, %c0_i32_0 : i32, i32
  }
  func.func @transform_6(%arg0: i32) -> (i32, i32) {
    %c0_i32 = arith.constant 0 : i32
    %c0_i32_0 = arith.constant 0 : i32
    %c0_i32_1 = arith.constant 0 : i32
    return %c0_i32, %c0_i32_0 : i32, i32
  }
  func.func @transform_7(%arg0: i32) -> (i32, i32) {
    %c0_i32 = arith.constant 0 : i32
    %c0_i32_0 = arith.constant 0 : i32
    return %arg0, %c0_i32 : i32, i32
  }
}

</mosaic_0001>

<llo_original>
// kernel: tpu_custom_call.1
$region0: #{tpu_custom_call.1}
  #allocation0 [shape = 'u32[]', space=smem, size = 0x4, offset = 0x4, fixed_abs, tag = 'smem constant byte address 0x4 - core index']
  #allocation1 [shape = 'u32[72,128]{1,0:T(1,128)}', space=vmem, size = 0x9000, scoped, tag = 'internal scratch']
  %s0 = inlined_call_operand.vmem [shape: f32[2,256], index: 0, kind: input, shape index: {}]
  %s1 = inlined_call_operand.vmem [shape: f32[2,8], index: 1, kind: input, shape index: {}]
  %s2 = inlined_call_operand.vmem [shape: f32[256,128], index: 2, kind: input, shape index: {}]
  %s3 = inlined_call_operand.vmem [shape: f32[1,128], index: 3, kind: input, shape index: {}]
  %s4 = inlined_call_operand.vmem [shape: f32[128,8], index: 4, kind: input, shape index: {}]
  %s5 = inlined_call_operand.vmem [shape: f32[8,256], index: 5, kind: input, shape index: {}]
  %s6 = inlined_call_operand.vmem [shape: f32[256,32], index: 6, kind: input, shape index: {}]
  %s7 = inlined_call_operand.hbm [shape: f32[2,32], index: 7, kind: output, shape index: {}]
  %s8 = sld [smem:[#allocation0]]
  $region38: #{tpu_custom_call.1} parent=0
    _
  %s10 = ssub.s32 1, %s8
  %s11 = scalar_select 0, %s10, %s8
  $region1: #{tpu_custom_call.1} parent=0
    #allocation2 [shape = 'u8[1024]{0}', space=vmem, size = 0x400, scoped, tag = 'output window, operand 0, single buffered']
    #allocation3 [shape = 's32[1]{0}', space=sflag, size = 0x4, scoped, tag = 'scoped memory for tpu_custom_call.1']
    %12 = vsyncpa [#allocation3], 0
    // Predicated region
    $region2: #{tpu_custom_call.1} parent=1 // pred_check
      _
    $region3: #{tpu_custom_call.1} parent=1 // pred_check_branch
      %14 = sbr.rel (0) target = $region5
    $region4: #{tpu_custom_call.1} parent=1 // pred_region
      _
    $region5: #{tpu_custom_call.1} parent=1 // pred_fallthru
      _
    // Predicated region
    $region6: #{tpu_custom_call.1} parent=1 // pred_check
      _
    $region7: #{tpu_custom_call.1} parent=1 // pred_check_branch
      %16 = sbr.rel (0) target = $region9
    $region8: #{tpu_custom_call.1} parent=1 // pred_region
      _
    $region9: #{tpu_custom_call.1} parent=1 // pred_fallthru
      _
    // Predicated region
    $region10: #{tpu_custom_call.1} parent=1 // pred_check
      _
    $region11: #{tpu_custom_call.1} parent=1 // pred_check_branch
      %18 = sbr.rel (0) target = $region13
    $region12: #{tpu_custom_call.1} parent=1 // pred_region
      _
    $region13: #{tpu_custom_call.1} parent=1 // pred_fallthru
      _
    // Predicated region
    $region14: #{tpu_custom_call.1} parent=1 // pred_check
      _
    $region15: #{tpu_custom_call.1} parent=1 // pred_check_branch
      %20 = sbr.rel (0) target = $region17
    $region16: #{tpu_custom_call.1} parent=1 // pred_region
      _
    $region17: #{tpu_custom_call.1} parent=1 // pred_fallthru
      _
    // Predicated region
    $region18: #{tpu_custom_call.1} parent=1 // pred_check
      _
    $region19: #{tpu_custom_call.1} parent=1 // pred_check_branch
      %22 = sbr.rel (0) target = $region21
    $region20: #{tpu_custom_call.1} parent=1 // pred_region
      _
    $region21: #{tpu_custom_call.1} parent=1 // pred_fallthru
      _
    // Predicated region
    $region22: #{tpu_custom_call.1} parent=1 // pred_check
      _
    $region23: #{tpu_custom_call.1} parent=1 // pred_check_branch
      %24 = sbr.rel (0) target = $region25
    $region24: #{tpu_custom_call.1} parent=1 // pred_region
      _
    $region25: #{tpu_custom_call.1} parent=1 // pred_fallthru
      _
    // Predicated region
    $region26: #{tpu_custom_call.1} parent=1 // pred_check
      _
    $region27: #{tpu_custom_call.1} parent=1 // pred_check_branch
      %26 = sbr.rel (0) target = $region29
    $region28: #{tpu_custom_call.1} parent=1 // pred_region
      _
    $region29: #{tpu_custom_call.1} parent=1 // pred_fallthru
      _
    %v27 = vld [vmem:[%s0] sm:$0xf]
    %v28 = vld [vmem:[%s2] sm:$0xff]
    %v29 = vld [vmem:[%s2 + $0x8] sm:$0xff]
    %v30 = vld [vmem:[%s2 + $0x10] sm:$0xff]
    %v31 = vld [vmem:[%s2 + $0x18] sm:$0xff]
    %v32 = vld [vmem:[%s2 + $0x20] sm:$0xff]
    %v33 = vld [vmem:[%s2 + $0x28] sm:$0xff]
    %v34 = vld [vmem:[%s2 + $0x30] sm:$0xff]
    %v35 = vld [vmem:[%s2 + $0x38] sm:$0xff]
    %v36 = vld [vmem:[%s2 + $0x40] sm:$0xff]
    %v37 = vld [vmem:[%s2 + $0x48] sm:$0xff]
    %v38 = vld [vmem:[%s2 + $0x50] sm:$0xff]
    %v39 = vld [vmem:[%s2 + $0x58] sm:$0xff]
    %v40 = vld [vmem:[%s2 + $0x60] sm:$0xff]
    %v41 = vld [vmem:[%s2 + $0x68] sm:$0xff]
    %v42 = vld [vmem:[%s2 + $0x70] sm:$0xff]
    %v43 = vld [vmem:[%s2 + $0x78] sm:$0xff]
    %v44 = vld [vmem:[%s2 + $0x80] sm:$0xff]
    %v45 = vld [vmem:[%s2 + $0x88] sm:$0xff]
    %v46 = vld [vmem:[%s2 + $0x90] sm:$0xff]
    %v47 = vld [vmem:[%s2 + $0x98] sm:$0xff]
    %v48 = vld [vmem:[%s2 + $0xa0] sm:$0xff]
    %v49 = vld [vmem:[%s2 + $0xa8] sm:$0xff]
    %v50 = vld [vmem:[%s2 + $0xb0] sm:$0xff]
    %v51 = vld [vmem:[%s2 + $0xb8] sm:$0xff]
    %v52 = vld [vmem:[%s2 + $0xc0] sm:$0xff]
    %v53 = vld [vmem:[%s2 + $0xc8] sm:$0xff]
    %v54 = vld [vmem:[%s2 + $0xd0] sm:$0xff]
    %v55 = vld [vmem:[%s2 + $0xd8] sm:$0xff]
    %v56 = vld [vmem:[%s2 + $0xe0] sm:$0xff]
    %v57 = vld [vmem:[%s2 + $0xe8] sm:$0xff]
    %v58 = vld [vmem:[%s2 + $0xf0] sm:$0xff]
    %v59 = vld [vmem:[%s2 + $0xf8] sm:$0xff]
    %v60 = vld [vmem:[%s3] sm:$0x1]
    %v62 = vperm.slane %v60, 0
    %65 = vst [vmem:[#allocation1] ss:$4 sm:$0xff] %v27
    %v66 = vld.sshfl [vmem:[#allocation1] sm:$0xff pattern:$0x73625140]
    %v67 = vld.sshfl [vmem:[#allocation1 + $0x8] sm:$0xff pattern:$0x73625140]
    %70 = vmatpush.msra.mxu0 %v43
    %71 = vmatpush.msra.mxu0 %v42
    %72 = vmatpush.msra.mxu0 %v41
    %73 = vmatpush.msra.mxu0 %v40
    %74 = vmatpush.msra.mxu0 %v39
    %75 = vmatpush.msra.mxu0 %v38
    %76 = vmatpush.msra.mxu0 %v37
    %77 = vmatpush.msra.mxu0 %v36
    %78 = vmatpush.msra.mxu0 %v35
    %79 = vmatpush.msra.mxu0 %v34
    %80 = vmatpush.msra.mxu0 %v33
    %81 = vmatpush.msra.mxu0 %v32
    %82 = vmatpush.msra.mxu0 %v31
    %83 = vmatpush.msra.mxu0 %v30
    %84 = vmatpush.msra.mxu0 %v29
    %85 = vmatpush.msra.mxu0 %v28
    %86 = vmatmul.f32.gmra.mxu0 %v66
    %v87 = vpop.f32.mrf.mxu0
    %v88 = vadd.f32 %v62, %v87
    %89 = vdwg.mxu0
    %90 = vmatpush.msra.mxu0 %v59
    %91 = vmatpush.msra.mxu0 %v58
    %92 = vmatpush.msra.mxu0 %v57
    %93 = vmatpush.msra.mxu0 %v56
    %94 = vmatpush.msra.mxu0 %v55
    %95 = vmatpush.msra.mxu0 %v54
    %96 = vmatpush.msra.mxu0 %v53
    %97 = vmatpush.msra.mxu0 %v52
    %98 = vmatpush.msra.mxu0 %v51
    %99 = vmatpush.msra.mxu0 %v50
    %100 = vmatpush.msra.mxu0 %v49
    %101 = vmatpush.msra.mxu0 %v48
    %102 = vmatpush.msra.mxu0 %v47
    %103 = vmatpush.msra.mxu0 %v46
    %104 = vmatpush.msra.mxu0 %v45
    %105 = vmatpush.msra.mxu0 %v44
    %106 = vmatmul.f32.gmra.mxu0 %v67
    %v107 = vpop.f32.mrf.mxu0
    %v108 = vadd.f32 %v88, %v107
    %109 = vdwg.mxu0
    %v110 = vtanh.pop %v108
    %v111 = vld [vmem:[%s4] sm:$0xff]
    %v112 = vld [vmem:[%s4 + $0x8] sm:$0xff]
    %v113 = vld [vmem:[%s4 + $0x10] sm:$0xff]
    %v114 = vld [vmem:[%s4 + $0x18] sm:$0xff]
    %v115 = vld [vmem:[%s4 + $0x20] sm:$0xff]
    %v116 = vld [vmem:[%s4 + $0x28] sm:$0xff]
    %v117 = vld [vmem:[%s4 + $0x30] sm:$0xff]
    %v118 = vld [vmem:[%s4 + $0x38] sm:$0xff]
    %v119 = vld [vmem:[%s4 + $0x40] sm:$0xff]
    %v120 = vld [vmem:[%s4 + $0x48] sm:$0xff]
    %v121 = vld [vmem:[%s4 + $0x50] sm:$0xff]
    %v122 = vld [vmem:[%s4 + $0x58] sm:$0xff]
    %v123 = vld [vmem:[%s4 + $0x60] sm:$0xff]
    %v124 = vld [vmem:[%s4 + $0x68] sm:$0xff]
    %v125 = vld [vmem:[%s4 + $0x70] sm:$0xff]
    %v126 = vld [vmem:[%s4 + $0x78] sm:$0xff]
    %127 = vmatpush.msra.mxu0 %v126
    %128 = vmatpush.msra.mxu0 %v125
    %129 = vmatpush.msra.mxu0 %v124
    %130 = vmatpush.msra.mxu0 %v123
    %131 = vmatpush.msra.mxu0 %v122
    %132 = vmatpush.msra.mxu0 %v121
    %133 = vmatpush.msra.mxu0 %v120
    %134 = vmatpush.msra.mxu0 %v119
    %135 = vmatpush.msra.mxu0 %v118
    %136 = vmatpush.msra.mxu0 %v117
    %137 = vmatpush.msra.mxu0 %v116
    %138 = vmatpush.msra.mxu0 %v115
    %139 = vmatpush.msra.mxu0 %v114
    %140 = vmatpush.msra.mxu0 %v113
    %141 = vmatpush.msra.mxu0 %v112
    %142 = vmatpush.msra.mxu0 %v111
    %143 = vmatmul.f32.gmra.mxu0 %v110
    %v144 = vpop.f32.mrf.mxu0
    %v145 = vadd.f32 0.0, %v144
    %146 = vdwg.mxu0
    %v147 = vmul.f32 %v145, 1.442695
    %v148 = vpow.pop %v147
    %v149 = vld [vmem:[%s1] sm:$0x3]
    %v150 = vmul.f32 %v148, %v149
    %vm151 = vcmask 58368
    %v152 = vsel %vm151, %v150, 0.0
    %153 = vadd.xlane.f32.xlu0 %v152
    %v154 = vpop.xlane.xlu0 %153
    %v155 = vadd.f32 %v154, 1e-08
    %v156 = vrcp.pop %v155
    %v157 = vmul.f32 %v155, %v156
    %v158 = vsub.f32 1.0, %v157
    %v159 = vmul.f32 %v156, %v158
    %v160 = vadd.f32 %v156, %v159
    %vm161 = vweird.f32 %v155
    %vm162 = vweird.f32 %v156
    %vm163 = vmor %vm161, %vm162
    %v164 = vsel %vm163, %v156, %v160
    %v165 = vand.u32 2147483647, %v155
    %vm166 = vcmp.eq.f32.partialorder %v165, 8.507059e+37
    %v167 = vand.u32 %v155, 2147483648
    %v168 = vor.u32 1.1754944e-38, %v167
    %v169 = vsel %vm166, %v168, %v164
    %v170 = vmul.f32 %v150, %v169
    %v171 = vld [vmem:[%s5] sm:$0xff]
    %v172 = vld [vmem:[%s5 + $0x8] sm:$0xff]
    %vm173 = vcmask 64512
    %v175 = vsel %vm173, %v170, 0
    %177 = vmatpush.msra.mxu0 0.0
    %178 = vmatpush.msra.mxu0 0.0
    %179 = vmatpush.msra.mxu0 0.0
    %180 = vmatpush.msra.mxu0 0.0
    %181 = vmatpush.msra.mxu0 0.0
    %182 = vmatpush.msra.mxu0 0.0
    %183 = vmatpush.msra.mxu0 0.0
    %184 = vmatpush.msra.mxu0 0.0
    %185 = vmatpush.msra.mxu0 0.0
    %186 = vmatpush.msra.mxu0 0.0
    %187 = vmatpush.msra.mxu0 0.0
    %188 = vmatpush.msra.mxu0 0.0
    %189 = vmatpush.msra.mxu0 0.0
    %190 = vmatpush.msra.mxu0 0.0
    %191 = vmatpush.msra.mxu0 0.0
    %192 = vmatpush.msra.mxu0 %v171
    %193 = vmatmul.f32.gmra.mxu0 %v175
    %v194 = vpop.f32.mrf.mxu0
    %v195 = vadd.f32 0.0, %v194
    %196 = vdwg.mxu0
    %197 = vmatpush.msra.mxu0 0.0
    %198 = vmatpush.msra.mxu0 0.0
    %199 = vmatpush.msra.mxu0 0.0
    %200 = vmatpush.msra.mxu0 0.0
    %201 = vmatpush.msra.mxu0 0.0
    %202 = vmatpush.msra.mxu0 0.0
    %203 = vmatpush.msra.mxu0 0.0
    %204 = vmatpush.msra.mxu0 0.0
    %205 = vmatpush.msra.mxu0 0.0
    %206 = vmatpush.msra.mxu0 0.0
    %207 = vmatpush.msra.mxu0 0.0
    %208 = vmatpush.msra.mxu0 0.0
    %209 = vmatpush.msra.mxu0 0.0
    %210 = vmatpush.msra.mxu0 0.0
    %211 = vmatpush.msra.mxu0 0.0
    %212 = vmatpush.msra.mxu0 %v172
    %213 = vmatmul.f32.gmra.mxu0 %v175
    %v214 = vpop.f32.mrf.mxu0
    %v215 = vadd.f32 0.0, %v214
    %216 = vdwg.mxu0
    %v219 = vrot.slane %v215, 6
    %vm220 = vcmask 1041408
    %v221 = vsel %vm220, %v195, %v219
    %v223 = vmul.f32 %v27, %v221
    %v224 = vld [vmem:[%s6] sm:$0xff]
    %v225 = vld [vmem:[%s6 + $0x8] sm:$0xff]
    %v226 = vld [vmem:[%s6 + $0x10] sm:$0xff]
    %v227 = vld [vmem:[%s6 + $0x18] sm:$0xff]
    %v228 = vld [vmem:[%s6 + $0x20] sm:$0xff]
    %v229 = vld [vmem:[%s6 + $0x28] sm:$0xff]
    %v230 = vld [vmem:[%s6 + $0x30] sm:$0xff]
    %v231 = vld [vmem:[%s6 + $0x38] sm:$0xff]
    %v232 = vld [vmem:[%s6 + $0x40] sm:$0xff]
    %v233 = vld [vmem:[%s6 + $0x48] sm:$0xff]
    %v234 = vld [vmem:[%s6 + $0x50] sm:$0xff]
    %v235 = vld [vmem:[%s6 + $0x58] sm:$0xff]
    %v236 = vld [vmem:[%s6 + $0x60] sm:$0xff]
    %v237 = vld [vmem:[%s6 + $0x68] sm:$0xff]
    %v238 = vld [vmem:[%s6 + $0x70] sm:$0xff]
    %v239 = vld [vmem:[%s6 + $0x78] sm:$0xff]
    %v240 = vld [vmem:[%s6 + $0x80] sm:$0xff]
    %v241 = vld [vmem:[%s6 + $0x88] sm:$0xff]
    %v242 = vld [vmem:[%s6 + $0x90] sm:$0xff]
    %v243 = vld [vmem:[%s6 + $0x98] sm:$0xff]
    %v244 = vld [vmem:[%s6 + $0xa0] sm:$0xff]
    %v245 = vld [vmem:[%s6 + $0xa8] sm:$0xff]
    %v246 = vld [vmem:[%s6 + $0xb0] sm:$0xff]
    %v247 = vld [vmem:[%s6 + $0xb8] sm:$0xff]
    %v248 = vld [vmem:[%s6 + $0xc0] sm:$0xff]
    %v249 = vld [vmem:[%s6 + $0xc8] sm:$0xff]
    %v250 = vld [vmem:[%s6 + $0xd0] sm:$0xff]
    %v251 = vld [vmem:[%s6 + $0xd8] sm:$0xff]
    %v252 = vld [vmem:[%s6 + $0xe0] sm:$0xff]
    %v253 = vld [vmem:[%s6 + $0xe8] sm:$0xff]
    %v254 = vld [vmem:[%s6 + $0xf0] sm:$0xff]
    %v255 = vld [vmem:[%s6 + $0xf8] sm:$0xff]
    %257 = vst [vmem:[#allocation1] ss:$4 sm:$0xff] %v223
    %v258 = vld.sshfl [vmem:[#allocation1] sm:$0xff pattern:$0x73625140]
    %v259 = vld.sshfl [vmem:[#allocation1 + $0x8] sm:$0xff pattern:$0x73625140]
    %262 = vmatpush.msra.mxu0 %v239
    %263 = vmatpush.msra.mxu0 %v238
    %264 = vmatpush.msra.mxu0 %v237
    %265 = vmatpush.msra.mxu0 %v236
    %266 = vmatpush.msra.mxu0 %v235
    %267 = vmatpush.msra.mxu0 %v234
    %268 = vmatpush.msra.mxu0 %v233
    %269 = vmatpush.msra.mxu0 %v232
    %270 = vmatpush.msra.mxu0 %v231
    %271 = vmatpush.msra.mxu0 %v230
    %272 = vmatpush.msra.mxu0 %v229
    %273 = vmatpush.msra.mxu0 %v228
    %274 = vmatpush.msra.mxu0 %v227
    %275 = vmatpush.msra.mxu0 %v226
    %276 = vmatpush.msra.mxu0 %v225
    %277 = vmatpush.msra.mxu0 %v224
    %278 = vmatmul.f32.gmra.mxu0 %v258
    %v279 = vpop.f32.mrf.mxu0
    %v280 = vadd.f32 0.0, %v279
    %281 = vdwg.mxu0
    %282 = vmatpush.msra.mxu0 %v255
    %283 = vmatpush.msra.mxu0 %v254
    %284 = vmatpush.msra.mxu0 %v253
    %285 = vmatpush.msra.mxu0 %v252
    %286 = vmatpush.msra.mxu0 %v251
    %287 = vmatpush.msra.mxu0 %v250
    %288 = vmatpush.msra.mxu0 %v249
    %289 = vmatpush.msra.mxu0 %v248
    %290 = vmatpush.msra.mxu0 %v247
    %291 = vmatpush.msra.mxu0 %v246
    %292 = vmatpush.msra.mxu0 %v245
    %293 = vmatpush.msra.mxu0 %v244
    %294 = vmatpush.msra.mxu0 %v243
    %295 = vmatpush.msra.mxu0 %v242
    %296 = vmatpush.msra.mxu0 %v241
    %297 = vmatpush.msra.mxu0 %v240
    %298 = vmatmul.f32.gmra.mxu0 %v259
    %v299 = vpop.f32.mrf.mxu0
    %v300 = vadd.f32 %v280, %v299
    %301 = vdwg.mxu0
    %vm302 = vcmask 254976
    %303 = vst.msk [vmem:[#allocation2] sm:$0x3] %vm302, %v300
    // Predicated region
    $region30: #{tpu_custom_call.1} parent=1 // pred_check
      _
    $region31: #{tpu_custom_call.1} parent=1 // pred_check_branch
      %305 = sbr.rel (0) target = $region33
    $region32: #{tpu_custom_call.1} parent=1 // pred_region
      %307 = vsyncadd [#allocation3], 0
      %s309 = sshll.u32 [#allocation2], 4
      %s310 = int_to_ptr.vmem [resolvable:$true] %s309
      %s311 = sshll.u32 %s7, 4
      %s312 = int_to_ptr.hbm [resolvable:$true] %s311
      %314 = dma.vmem_to_hbm [thread:$0]  %s310, 32, %s312, [#allocation3]
    $region33: #{tpu_custom_call.1} parent=1 // pred_fallthru
      _
    // Predicated region
    $region34: #{tpu_custom_call.1} parent=1 // pred_check
      _
    $region35: #{tpu_custom_call.1} parent=1 // pred_check_branch
      %316 = sbr.rel (0) target = $region37
    $region36: #{tpu_custom_call.1} parent=1 // pred_region
      %318 = dma.done [#allocation3], 32
    $region37: #{tpu_custom_call.1} parent=1 // pred_fallthru
      _
    %319 = vsyncpa [#allocation3], 1

</llo_original>
